<compile_context>
chip_gen: v5e
topology: v5e:2x2
jax: 0.10.0
libtpu: 0.0.40
codegen_flags: <defaults>
</compile_context>

<pallas_src>
import functools
import math

import numpy as np
import jax
import jax.numpy as jnp
from jax.experimental import pallas as pl
from jax.experimental.pallas import tpu as pltpu  # noqa: F401  (TPU backend assumed)

# ----------------------------- config ---------------------------------------
IMG = 32          # input spatial size
PATCH = 4         # patch-embed kernel/stride (matches nn.Conv2d(k=4, s=4, bias=False))
IN_CH = 2         # in_channels=2 from the module
EMBED = 16        # embed dim (scaled-down)
DEPTHS = (2, 2)   # blocks per stage (scaled-down)
HEADS = (2, 4)
WINDOW = 4
MLP_RATIO = 4
CPB_HIDDEN = 64   # stand-in for the 512-wide CPB MLP
BACKBONE_OUT = 40 # stand-in for backbone.head.out_features (=1000 in torchvision)
HIDDEN = 32       # classifier hidden_dim
NUM_CLASSES = 3
LN_EPS = 1e-5

_INV_SQRT2 = 1.0 / math.sqrt(2.0)


def _gelu(x):
    # exact (erf) GELU, matching nn.GELU() default
    return 0.5 * x * (1.0 + jax.lax.erf(x * _INV_SQRT2))


def _ln(x, g, b, eps):
    mu = jnp.mean(x, axis=-1, keepdims=True)
    xc = x - mu
    var = jnp.mean(xc * xc, axis=-1, keepdims=True)
    return xc * jax.lax.rsqrt(var + eps) * g + b


# ----------------------------- Pallas kernels --------------------------------
def _linear_kernel(x_ref, w_ref, b_ref, o_ref, *, act):
    y = jnp.dot(x_ref[...], w_ref[...], preferred_element_type=jnp.float32) + b_ref[...]
    if act == "relu":
        y = jnp.maximum(y, 0.0)
    elif act == "gelu":
        y = _gelu(y)
    o_ref[...] = y.astype(o_ref.dtype)


def linear_pallas(x, w, b=None, act="none"):
    """y = act(x @ w + b), single whole-array VMEM block (used only at prepare time)."""
    shape = x.shape
    K = shape[-1]
    N = w.shape[1]
    x2 = x.reshape(-1, K).astype(jnp.float32)
    if b is None:
        b = jnp.zeros((N,), jnp.float32)
    out = pl.pallas_call(
        functools.partial(_linear_kernel, act=act),
        out_shape=jax.ShapeDtypeStruct((x2.shape[0], N), jnp.float32),
    )(x2, w.astype(jnp.float32), b.reshape(1, N).astype(jnp.float32))
    return out.reshape(shape[:-1] + (N,))


def _linear_ln_kernel(x_ref, w_ref, g_ref, b_ref, o_ref, *, eps):
    # fused (bias-free) linear followed by LayerNorm (patch-embed, patch-merging)
    y = jnp.dot(x_ref[...], w_ref[...], preferred_element_type=jnp.float32)
    o_ref[...] = _ln(y, g_ref[...], b_ref[...], eps).astype(o_ref.dtype)


def linear_ln_pallas(x, w, g, b):
    shape = x.shape
    K = shape[-1]
    N = w.shape[1]
    x2 = x.reshape(-1, K).astype(jnp.float32)
    out = pl.pallas_call(
        functools.partial(_linear_ln_kernel, eps=LN_EPS),
        out_shape=jax.ShapeDtypeStruct((x2.shape[0], N), jnp.float32),
    )(x2, w.astype(jnp.float32),
      g.reshape(1, N).astype(jnp.float32), b.reshape(1, N).astype(jnp.float32))
    return out.reshape(shape[:-1] + (N,))


def _swin_block_kernel(x_ref, qkvw_ref, qkvb_ref, scale_ref, bias_ref,
                       projw_ref, projb_ref, n1w_ref, n1b_ref,
                       w1_ref, b1_ref, w2_ref, b2_ref, n2w_ref, n2b_ref,
                       o_ref, *, B, nW, heads, N, eps):
    """Whole Swin-V2 block on windowed tokens.

    x_ref: (M, C) with M = B*nW*N tokens already roll+window-partitioned outside.
    Residual-post-norm ordering (V2):  y = x + LN1(attn(x));  z = y + LN2(MLP(y)).
    """
    x = x_ref[...].astype(jnp.float32)                       # (M, C)
    C = x.shape[-1]
    hd = C // heads
    Bw = B * nW
    M = Bw * N

    # ---- attention ----
    qkv = jnp.dot(x, qkvw_ref[...], preferred_element_type=jnp.float32) + qkvb_ref[...]

    head_outs = []
    for hh in range(heads):                                  # heads is tiny & static
        qh = qkv[:, hh * hd:(hh + 1) * hd].reshape(Bw, N, hd)
        kh = qkv[:, C + hh * hd:C + (hh + 1) * hd].reshape(Bw, N, hd)
        vh = qkv[:, 2 * C + hh * hd:2 * C + (hh + 1) * hd].reshape(Bw, N, hd)
        # cosine attention: L2-normalize q,k (rsqrt), per-head clamped logit scale
        qn = qh * jax.lax.rsqrt(jnp.sum(qh * qh, axis=-1, keepdims=True) + 1e-12)
        kn = kh * jax.lax.rsqrt(jnp.sum(kh * kh, axis=-1, keepdims=True) + 1e-12)
        qn = qn * scale_ref[hh]                              # (N,1) broadcast, scale folded into q
        attn = jnp.einsum("bnd,bmd->bnm", qn, kn,
                          preferred_element_type=jnp.float32)  # (Bw, N, N)
        # add precomputed CPB relative-position bias + shift mask, shared across batch
        attn = (attn.reshape(B, nW, N, N) + bias_ref[hh][None]).reshape(Bw, N, N)
        attn = attn - jnp.max(attn, axis=-1, keepdims=True)
        p = jnp.exp(attn)
        p = p * pl.reciprocal(jnp.sum(p, axis=-1, keepdims=True), approx=True)
        oh = jnp.einsum("bnm,bmd->bnd", p, vh, preferred_element_type=jnp.float32)
        head_outs.append(oh.reshape(M, hd))
    o = jnp.concatenate(head_outs, axis=-1)                  # (M, C)

    o = jnp.dot(o, projw_ref[...], preferred_element_type=jnp.float32) + projb_ref[...]
    y = x + _ln(o, n1w_ref[...], n1b_ref[...], eps)          # residual-post-norm

    # ---- MLP ----
    m = _gelu(jnp.dot(y, w1_ref[...], preferred_element_type=jnp.float32) + b1_ref[...])
    m = jnp.dot(m, w2_ref[...], preferred_element_type=jnp.float32) + b2_ref[...]
    z = y + _ln(m, n2w_ref[...], n2b_ref[...], eps)
    o_ref[...] = z.astype(o_ref.dtype)


def _tail_kernel(h_ref, pool_ref, nfw_ref, nfb_ref, hw_ref, hb_ref,
                 c1w_ref, c1b_ref, clnw_ref, clnb_ref, c2w_ref, c2b_ref,
                 o_ref, *, eps):
    """final LN -> global avg pool (as matmul) -> backbone head -> classifier."""
    x = _ln(h_ref[...].astype(jnp.float32), nfw_ref[...], nfb_ref[...], eps)   # (B*T, C)
    pooled = jnp.dot(pool_ref[...], x, preferred_element_type=jnp.float32)     # (B, C)
    y = jnp.dot(pooled, hw_ref[...], preferred_element_type=jnp.float32) + hb_ref[...]
    y = jnp.dot(y, c1w_ref[...], preferred_element_type=jnp.float32) + c1b_ref[...]
    y = _gelu(_ln(y, clnw_ref[...], clnb_ref[...], eps))
    # TODO(synk): Dropout(0.2) is an eval-mode identity here.
    y = jnp.dot(y, c2w_ref[...], preferred_element_type=jnp.float32) + c2b_ref[...]
    o_ref[...] = y.astype(o_ref.dtype)


# ----------------------------- static helpers (prepare-time) -----------------
def relative_position_bias(cpb_w1, cpb_b1, cpb_w2, heads, ws):
    # V2 continuous relative position bias (CPB MLP), input-independent.
    rel = np.arange(-(ws - 1), ws, dtype=np.float32)
    table = np.stack(np.meshgrid(rel, rel, indexing="ij"), axis=-1)  # (2ws-1,2ws-1,2)
    table = table / (ws - 1)
    table = table * 8.0
    table = np.sign(table) * np.log2(np.abs(table) + 1.0) / 3.0
    table = jnp.asarray(table.reshape(-1, 2))                        # ((2ws-1)^2, 2)
    h = linear_pallas(table, cpb_w1, cpb_b1, act="relu")
    bias_table = linear_pallas(h, cpb_w2, None)                      # ((2ws-1)^2, heads)

    coords = np.stack(np.meshgrid(np.arange(ws), np.arange(ws), indexing="ij"))
    cf = coords.reshape(2, -1)
    rc = (cf[:, :, None] - cf[:, None, :]).transpose(1, 2, 0).astype(np.int64)
    rc[:, :, 0] += ws - 1
    rc[:, :, 1] += ws - 1
    rc[:, :, 0] *= 2 * ws - 1
    idx = rc.sum(-1).reshape(-1)
    N = ws * ws
    bias = bias_table[jnp.asarray(idx)].reshape(N, N, heads).transpose((2, 0, 1))
    return 16.0 * jax.nn.sigmoid(bias)                               # (heads, N, N)


def make_attn_mask(H, W, ws, shift):
    nW = (H // ws) * (W // ws)
    N = ws * ws
    if shift == 0:
        return jnp.zeros((nW, N, N), jnp.float32)
    img = np.zeros((H, W), np.float32)
    cnt = 0
    for h0, h1 in ((0, H - ws), (H - ws, H - shift), (H - shift, H)):
        for w0, w1 in ((0, W - ws), (W - ws, W - shift), (W - shift, W)):
            img[h0:h1, w0:w1] = cnt
            cnt += 1
    m = img.reshape(H // ws, ws, W // ws, ws).transpose(0, 2, 1, 3).reshape(nW, N)
    diff = m[:, None, :] - m[:, :, None]
    return jnp.asarray(np.where(diff != 0, -100.0, 0.0).astype(np.float32))


def _effective_shift(block_idx, ws, H, W):
    shift = 0 if block_idx % 2 == 0 else ws // 2
    if ws >= H and ws >= W:   # H == W everywhere in this model
        shift = 0
    return shift


# ----------------------------- model pieces ----------------------------------
def swin_block(x, blk, heads, ws, block_idx):
    B, H, W, C = x.shape
    shift = _effective_shift(block_idx, ws, H, W)
    nWh, nWw = H // ws, W // ws
    nW = nWh * nWw
    N = ws * ws

    xs = jnp.roll(x, shift=(-shift, -shift), axis=(1, 2)) if shift else x
    xw = xs.reshape(B, nWh, ws, nWw, ws, C).transpose(0, 1, 3, 2, 4, 5)
    xw = xw.reshape(B * nW * N, C)

    z = pl.pallas_call(
        functools.partial(_swin_block_kernel, B=B, nW=nW, heads=heads, N=N, eps=LN_EPS),
        out_shape=jax.ShapeDtypeStruct((B * nW * N, C), jnp.float32),
    )(xw, blk["qkv_w"], blk["qkv_b"], blk["attn_scale"], blk["attn_bias"],
      blk["proj_w"], blk["proj_b"], blk["norm1_w"], blk["norm1_b"],
      blk["mlp_w1"], blk["mlp_b1"], blk["mlp_w2"], blk["mlp_b2"],
      blk["norm2_w"], blk["norm2_b"])

    z = z.reshape(B, nWh, nWw, ws, ws, C).transpose(0, 1, 3, 2, 4, 5).reshape(B, H, W, C)
    if shift:
        z = jnp.roll(z, shift=(shift, shift), axis=(1, 2))
    return z


def patch_merging(x, merge):
    x0 = x[:, 0::2, 0::2, :]
    x1 = x[:, 1::2, 0::2, :]
    x2 = x[:, 0::2, 1::2, :]
    x3 = x[:, 1::2, 1::2, :]
    xc = jnp.concatenate([x0, x1, x2, x3], axis=-1)                  # (B, H/2, W/2, 4C)
    # V2: linear (bias=False) then norm — fused into one kernel
    return linear_ln_pallas(xc, merge["red_w"], merge["norm_w"], merge["norm_b"])


def forward(params, x):
    # x: (B, IN_CH, IMG, IMG) NCHW float32
    B = x.shape[0]
    H4 = IMG // PATCH
    # patch-embed Conv2d(k=4, s=4, bias=False) as patch-flatten + fused matmul+LN
    xp = x.reshape(B, IN_CH, H4, PATCH, H4, PATCH).transpose(0, 2, 4, 1, 3, 5)
    xp = xp.reshape(B, H4, H4, IN_CH * PATCH * PATCH)
    h = linear_ln_pallas(xp, params["patch_w"], params["patch_norm_w"], params["patch_norm_b"])

    for s, stage in enumerate(params["stages"]):
        heads = HEADS[s]
        for bi, blk in enumerate(stage["blocks"]):
            h = swin_block(h, blk, heads, WINDOW, bi)
        if stage["merge"] is not None:
            h = patch_merging(h, stage["merge"])

    Bh, Hf, Wf, C = h.shape
    T = Hf * Wf
    # block-diagonal 1/T pooling matrix (AdaptiveAvgPool2d(1)+flatten as a matmul)
    pool = jnp.asarray(np.kron(np.eye(Bh, dtype=np.float32),
                               np.ones((1, T), np.float32) / T))
    out = pl.pallas_call(
        functools.partial(_tail_kernel, eps=LN_EPS),
        out_shape=jax.ShapeDtypeStruct((Bh, NUM_CLASSES), jnp.float32),
    )(h.reshape(Bh * T, C), pool,
      params["final_norm_w"].reshape(1, C), params["final_norm_b"].reshape(1, C),
      params["head_w"], params["head_b"].reshape(1, -1),
      params["cls_w1"], params["cls_b1"].reshape(1, -1),
      params["cls_ln_w"].reshape(1, -1), params["cls_ln_b"].reshape(1, -1),
      params["cls_w2"], params["cls_b2"].reshape(1, -1))
    return out


# ----------------------------- parameter init & prepare ----------------------
def init_params(key):
    keys = iter(jax.random.split(key, 256))

    def nrm(shape, std=0.02):
        return jax.random.normal(next(keys), shape, jnp.float32) * std

    params = {
        "patch_w": nrm((IN_CH * PATCH * PATCH, EMBED)),
        "patch_norm_w": jnp.ones((EMBED,), jnp.float32),
        "patch_norm_b": jnp.zeros((EMBED,), jnp.float32),
    }
    stages = []
    dim = EMBED
    for s, depth in enumerate(DEPTHS):
        heads = HEADS[s]
        blocks = []
        for bi in range(depth):
            blocks.append({
                "qkv_w": nrm((dim, 3 * dim)),
                "qkv_b": nrm((3 * dim,)),
                "proj_w": nrm((dim, dim)),
                "proj_b": nrm((dim,)),
                "logit_scale": jnp.full((heads,), math.log(10.0), jnp.float32),
                "cpb_w1": nrm((2, CPB_HIDDEN)),
                "cpb_b1": nrm((CPB_HIDDEN,)),
                "cpb_w2": nrm((CPB_HIDDEN, heads)),
                "norm1_w": jnp.ones((dim,), jnp.float32),
                "norm1_b": jnp.zeros((dim,), jnp.float32),
                "norm2_w": jnp.ones((dim,), jnp.float32),
                "norm2_b": jnp.zeros((dim,), jnp.float32),
                "mlp_w1": nrm((dim, MLP_RATIO * dim)),
                "mlp_b1": nrm((MLP_RATIO * dim,)),
                "mlp_w2": nrm((MLP_RATIO * dim, dim)),
                "mlp_b2": nrm((dim,)),
            })
        merge = None
        if s < len(DEPTHS) - 1:
            merge = {
                "red_w": nrm((4 * dim, 2 * dim)),
                "norm_w": jnp.ones((2 * dim,), jnp.float32),
                "norm_b": jnp.zeros((2 * dim,), jnp.float32),
            }
            dim *= 2
        stages.append({"blocks": blocks, "merge": merge})
    params["stages"] = stages
    num_features = dim
    params["final_norm_w"] = jnp.ones((num_features,), jnp.float32)
    params["final_norm_b"] = jnp.zeros((num_features,), jnp.float32)
    params["head_w"] = nrm((num_features, BACKBONE_OUT))
    params["head_b"] = nrm((BACKBONE_OUT,))
    params["cls_w1"] = nrm((BACKBONE_OUT, HIDDEN))
    params["cls_b1"] = nrm((HIDDEN,))
    params["cls_ln_w"] = jnp.ones((HIDDEN,), jnp.float32)
    params["cls_ln_b"] = jnp.zeros((HIDDEN,), jnp.float32)
    params["cls_w2"] = nrm((HIDDEN, NUM_CLASSES))
    params["cls_b2"] = nrm((NUM_CLASSES,))
    return params


def prepare_params(raw):
    """Hoist all input-independent work out of the forward pass (done once)."""
    p = {k: raw[k] for k in
         ("patch_w", "patch_norm_w", "patch_norm_b",
          "final_norm_w", "final_norm_b", "head_w", "head_b",
          "cls_w1", "cls_b1", "cls_ln_w", "cls_ln_b", "cls_w2", "cls_b2")}
    H = IMG // PATCH
    dim = EMBED
    stages = []
    for s, depth in enumerate(DEPTHS):
        heads = HEADS[s]
        N = WINDOW * WINDOW
        blocks = []
        for bi in range(depth):
            blk = raw["stages"][s]["blocks"][bi]
            C = dim
            shift = _effective_shift(bi, WINDOW, H, H)
            rel_bias = relative_position_bias(blk["cpb_w1"], blk["cpb_b1"],
                                              blk["cpb_w2"], heads, WINDOW)      # (heads,N,N)
            mask = make_attn_mask(H, H, WINDOW, shift)                           # (nW,N,N)
            attn_bias = rel_bias[:, None, :, :] + mask[None, :, :, :]            # (heads,nW,N,N)
            # V2: k-bias forced to zero; precompute once
            qkv_b = blk["qkv_b"].at[C:2 * C].set(0.0).reshape(1, 3 * C)
            # clamped, exponentiated logit scale, broadcast to (heads, N, 1)
            scale = jnp.exp(jnp.minimum(blk["logit_scale"], math.log(100.0)))
            scale = jnp.broadcast_to(scale[:, None, None], (heads, N, 1)).astype(jnp.float32)
            blocks.append({
                "qkv_w": blk["qkv_w"],
                "qkv_b": qkv_b,
                "attn_scale": scale,
                "attn_bias": attn_bias.astype(jnp.float32),
                "proj_w": blk["proj_w"],
                "proj_b": blk["proj_b"].reshape(1, C),
                "norm1_w": blk["norm1_w"].reshape(1, C),
                "norm1_b": blk["norm1_b"].reshape(1, C),
                "mlp_w1": blk["mlp_w1"],
                "mlp_b1": blk["mlp_b1"].reshape(1, MLP_RATIO * C),
                "mlp_w2": blk["mlp_w2"],
                "mlp_b2": blk["mlp_b2"].reshape(1, C),
                "norm2_w": blk["norm2_w"].reshape(1, C),
                "norm2_b": blk["norm2_b"].reshape(1, C),
            })
        merge = None
        if raw["stages"][s]["merge"] is not None:
            merge = dict(raw["stages"][s]["merge"])
            dim *= 2
            H //= 2
        stages.append({"blocks": blocks, "merge": merge})
    p["stages"] = stages
    return p


# ----------------------------- main ------------------------------------------
if __name__ == "__main__":
    key = jax.random.PRNGKey(0)
    pkey, xkey = jax.random.split(key)
    raw_params = init_params(pkey)
    params = prepare_params(raw_params)          # one-time hoisted precompute
    x = jax.random.normal(xkey, (2, IN_CH, IMG, IMG), jnp.float32)

    fwd = jax.jit(forward)
    out = jax.block_until_ready(fwd(params, x))
    assert out.shape == (2, NUM_CLASSES) and out.dtype == jnp.float32
    assert bool(jnp.all(jnp.isfinite(out)))
    print("KERNEL_OK")
</pallas_src>

<mosaic_0001>
module attributes {stable_mosaic.version = 11 : i64} {
  func.func @_linear_kernel(%arg0: memref<49x2xf32, #tpu.memory_space<vmem>>, %arg1: memref<2x64xf32, #tpu.memory_space<vmem>>, %arg2: memref<1x64xf32, #tpu.memory_space<vmem>>, %arg3: memref<49x64xf32, #tpu.memory_space<vmem>>) attributes {dimension_semantics = [], scalar_prefetch = 0 : i64, scratch_operands = 0 : i64, tpu.core_type = #tpu.core_type<tc>} {
    %c0 = arith.constant 0 : index
    %c0_0 = arith.constant 0 : index
    %0 = vector.load %arg0[%c0, %c0_0] : memref<49x2xf32, #tpu.memory_space<vmem>>, vector<49x2xf32>
    %c0_1 = arith.constant 0 : index
    %c0_2 = arith.constant 0 : index
    %1 = vector.load %arg1[%c0_1, %c0_2] : memref<2x64xf32, #tpu.memory_space<vmem>>, vector<2x64xf32>
    %cst = arith.constant dense<0.000000e+00> : vector<49x64xf32>
    %2 = tpu.matmul %0, %1, %cst {dimension_numbers = #tpu.dot_dimension_numbers<[1], [0], [0], [1], [0, 0, 1, 1], [], []>} : vector<49x2xf32>, vector<2x64xf32>, vector<49x64xf32> -> vector<49x64xf32>
    %c0_3 = arith.constant 0 : index
    %c0_4 = arith.constant 0 : index
    %3 = vector.load %arg2[%c0_3, %c0_4] : memref<1x64xf32, #tpu.memory_space<vmem>>, vector<1x64xf32>
    %4 = vector.broadcast %3 : vector<1x64xf32> to vector<49x64xf32>
    %5 = arith.addf %2, %4 : vector<49x64xf32>
    %cst_5 = arith.constant 0.000000e+00 : f32
    %6 = vector.broadcast %cst_5 : f32 to vector<49x64xf32>
    %7 = arith.maximumf %5, %6 : vector<49x64xf32>
    %c0_6 = arith.constant 0 : index
    %c0_7 = arith.constant 0 : index
    %8 = vector.load %arg3[%c0_6, %c0_7] : memref<49x64xf32, #tpu.memory_space<vmem>>, vector<49x64xf32>
    tpu.vector_store %arg3[%c0_6, %c0_7], %7 {strides = array<i32>} : memref<49x64xf32, #tpu.memory_space<vmem>>, vector<49x64xf32>,
    return
  }
}

</mosaic_0001>

<llo_original>
// kernel: tpu_custom_call.1
$region0: #{tpu_custom_call.1}
  #allocation0 [shape = 'u32[]', space=smem, size = 0x4, offset = 0x4, fixed_abs, tag = 'smem constant byte address 0x4 - core index']
  #allocation1 [shape = 'u32[72,128]{1,0:T(1,128)}', space=vmem, size = 0x9000, scoped, tag = 'internal scratch']
  %s0 = inlined_call_operand.vmem [shape: f32[49,2], index: 0, kind: input, shape index: {}]
  %s1 = inlined_call_operand.vmem [shape: f32[2,64], index: 1, kind: input, shape index: {}]
  %s2 = inlined_call_operand.vmem [shape: f32[1,64], index: 2, kind: input, shape index: {}]
  %s3 = inlined_call_operand.hbm [shape: f32[49,64], index: 3, kind: output, shape index: {}]
  %s4 = sld [smem:[#allocation0]]
  $region22: #{tpu_custom_call.1} parent=0
    _
  %s6 = ssub.s32 1, %s4
  %s7 = scalar_select 0, %s6, %s4
  $region1: #{tpu_custom_call.1} parent=0
    #allocation2 [shape = 'u8[28672]{0}', space=vmem, size = 0x7000, scoped, tag = 'output window, operand 0, single buffered']
    #allocation3 [shape = 's32[1]{0}', space=sflag, size = 0x4, scoped, tag = 'scoped memory for tpu_custom_call.1']
    %8 = vsyncpa [#allocation3], 0
    // Predicated region
    $region2: #{tpu_custom_call.1} parent=1 // pred_check
      _
    $region3: #{tpu_custom_call.1} parent=1 // pred_check_branch
      %10 = sbr.rel (0) target = $region5
    $region4: #{tpu_custom_call.1} parent=1 // pred_region
      _
    $region5: #{tpu_custom_call.1} parent=1 // pred_fallthru
      _
    // Predicated region
    $region6: #{tpu_custom_call.1} parent=1 // pred_check
      _
    $region7: #{tpu_custom_call.1} parent=1 // pred_check_branch
      %12 = sbr.rel (0) target = $region9
    $region8: #{tpu_custom_call.1} parent=1 // pred_region
      _
    $region9: #{tpu_custom_call.1} parent=1 // pred_fallthru
      _
    // Predicated region
    $region10: #{tpu_custom_call.1} parent=1 // pred_check
      _
    $region11: #{tpu_custom_call.1} parent=1 // pred_check_branch
      %14 = sbr.rel (0) target = $region13
    $region12: #{tpu_custom_call.1} parent=1 // pred_region
      _
    $region13: #{tpu_custom_call.1} parent=1 // pred_fallthru
      _
    %v15 = vld [vmem:[%s0] sm:$0xff]
    %v16 = vld [vmem:[%s0 + $0x8] sm:$0xff]
    %v17 = vld [vmem:[%s0 + $0x10] sm:$0xff]
    %v18 = vld [vmem:[%s0 + $0x18] sm:$0xff]
    %v19 = vld [vmem:[%s0 + $0x20] sm:$0xff]
    %v20 = vld [vmem:[%s0 + $0x28] sm:$0xff]
    %v21 = vld [vmem:[%s0 + $0x30] sm:$0x1]
    %v22 = vld [vmem:[%s1] sm:$0x3]
    %v23 = vld [vmem:[%s2] sm:$0x1]
    %v25 = vperm.slane %v23, 0
    %vm27 = vcmask 15360
    %v29 = vsel %vm27, %v15, 0
    %v32 = vsel %vm27, %v16, 0
    %v35 = vsel %vm27, %v17, 0
    %v38 = vsel %vm27, %v18, 0
    %v41 = vsel %vm27, %v19, 0
    %v44 = vsel %vm27, %v20, 0
    %v47 = vsel %vm27, %v21, 0
    %vm49 = vcmask 1041408
    %v51 = vsel %vm49, %v22, 0
    %53 = vmatpush.msra.mxu0 0.0
    %54 = vmatpush.msra.mxu0 0.0
    %55 = vmatpush.msra.mxu0 0.0
    %56 = vmatpush.msra.mxu0 0.0
    %57 = vmatpush.msra.mxu0 0.0
    %58 = vmatpush.msra.mxu0 0.0
    %59 = vmatpush.msra.mxu0 0.0
    %60 = vmatpush.msra.mxu0 0.0
    %61 = vmatpush.msra.mxu0 0.0
    %62 = vmatpush.msra.mxu0 0.0
    %63 = vmatpush.msra.mxu0 0.0
    %64 = vmatpush.msra.mxu0 0.0
    %65 = vmatpush.msra.mxu0 0.0
    %66 = vmatpush.msra.mxu0 0.0
    %67 = vmatpush.msra.mxu0 0.0
    %68 = vmatpush.msra.mxu0 %v51
    %69 = vmatmul.f32.gmra.mxu0 %v29
    %v70 = vpop.f32.mrf.mxu0
    %v71 = vadd.f32 %v25, %v70
    %72 = vmatmul.f32.gmra.mxu0 %v32
    %v73 = vpop.f32.mrf.mxu0
    %v74 = vadd.f32 %v25, %v73
    %75 = vmatmul.f32.gmra.mxu0 %v35
    %v76 = vpop.f32.mrf.mxu0
    %v77 = vadd.f32 %v25, %v76
    %78 = vmatmul.f32.gmra.mxu0 %v38
    %v79 = vpop.f32.mrf.mxu0
    %v80 = vadd.f32 %v25, %v79
    %81 = vmatmul.f32.gmra.mxu0 %v41
    %v82 = vpop.f32.mrf.mxu0
    %v83 = vadd.f32 %v25, %v82
    %84 = vmatmul.f32.gmra.mxu0 %v44
    %v85 = vpop.f32.mrf.mxu0
    %v86 = vadd.f32 %v25, %v85
    %87 = vmatmul.f32.gmra.mxu0 %v47
    %v88 = vpop.f32.mrf.mxu0
    %v89 = vadd.f32 %v25, %v88
    %90 = vdwg.mxu0
    %v91 = vmax.f32 %v71, 0.0
    %v92 = vmax.f32 %v74, 0.0
    %v93 = vmax.f32 %v77, 0.0
    %v94 = vmax.f32 %v80, 0.0
    %v95 = vmax.f32 %v83, 0.0
    %v96 = vmax.f32 %v86, 0.0
    %v97 = vmax.f32 %v89, 0.0
    %vm98 = vcmask 523264
    %99 = vst.msk [vmem:[#allocation2] sm:$0xff] %vm98, %v91
    %100 = vst.msk [vmem:[#allocation2 + $0x8] sm:$0xff] %vm98, %v92
    %101 = vst.msk [vmem:[#allocation2 + $0x10] sm:$0xff] %vm98, %v93
    %102 = vst.msk [vmem:[#allocation2 + $0x18] sm:$0xff] %vm98, %v94
    %103 = vst.msk [vmem:[#allocation2 + $0x20] sm:$0xff] %vm98, %v95
    %104 = vst.msk [vmem:[#allocation2 + $0x28] sm:$0xff] %vm98, %v96
    %vm105 = vcmask 516096
    %106 = vst.msk [vmem:[#allocation2 + $0x30] sm:$0x1] %vm105, %v97
    // Predicated region
    $region14: #{tpu_custom_call.1} parent=1 // pred_check
      _
    $region15: #{tpu_custom_call.1} parent=1 // pred_check_branch
      %108 = sbr.rel (0) target = $region17
    $region16: #{tpu_custom_call.1} parent=1 // pred_region
      %110 = vsyncadd [#allocation3], 0
      %s111 = sshll.u32 [#allocation2], 4
      %s112 = int_to_ptr.vmem [resolvable:$true] %s111
      %s113 = sshll.u32 %s3, 4
      %s114 = int_to_ptr.hbm [resolvable:$true] %s113
      %119 = dma.vmem_to_hbm [thread:$0]  %s112, 896, %s114, [#allocation3], 128, 128, 8
    $region17: #{tpu_custom_call.1} parent=1 // pred_fallthru
      _
    // Predicated region
    $region18: #{tpu_custom_call.1} parent=1 // pred_check
      _
    $region19: #{tpu_custom_call.1} parent=1 // pred_check_branch
      %121 = sbr.rel (0) target = $region21
    $region20: #{tpu_custom_call.1} parent=1 // pred_region
      %123 = dma.done [#allocation3], 896
    $region21: #{tpu_custom_call.1} parent=1 // pred_fallthru
      _
    %124 = vsyncpa [#allocation3], 1

</llo_original>
